<compile_context>
chip_gen: v5e
topology: v5e:2x2
jax: 0.10.0
libtpu: 0.0.40
codegen_flags: <defaults>
</compile_context>

<pallas_src>
import functools

import jax
import jax.numpy as jnp
from jax.experimental import pallas as pl
from jax.experimental.pallas import tpu as pltpu

D_IN = 640
D_HID = 64
D_HID_PAD = 128   # hidden dim padded to a full lane width
D_OUT = 640


def mlp_kernel(x_ref, w1_ref, b1_ref, w2_ref, b2_ref, o_ref):
    # x tile: (TB, 640) f32 -> bf16 for the MXU (f32 accumulation retained).
    x = x_ref[...].astype(jnp.bfloat16)
    h = jnp.dot(x, w1_ref[...], preferred_element_type=jnp.float32)   # (TB, 128) f32
    h = jnp.maximum(h + b1_ref[...], 0.0)                             # bias + ReLU in f32
    y = jnp.dot(h.astype(jnp.bfloat16), w2_ref[...],
                preferred_element_type=jnp.float32)                   # (TB, 640) f32
    o_ref[...] = (y + b2_ref[...]).astype(o_ref.dtype)


def prepare_params(w1, b1, w2, b2):
    """Pad hidden dim 64->128 (zeros) and store weights in bf16 at rest."""
    w1p = jnp.zeros((D_IN, D_HID_PAD), jnp.float32).at[:, :D_HID].set(w1)
    b1p = jnp.zeros((1, D_HID_PAD), jnp.float32).at[:, :D_HID].set(b1)
    w2p = jnp.zeros((D_HID_PAD, D_OUT), jnp.float32).at[:D_HID, :].set(w2)
    return (w1p.astype(jnp.bfloat16), b1p,
            w2p.astype(jnp.bfloat16), b2.astype(jnp.float32))


@functools.partial(jax.jit, static_argnames=("tb",))
def mlp_forward(x, w1p, b1p, w2p, b2p, *, tb=512):
    B = x.shape[0]
    TB = min(tb, B)                      # small batches: one full-array block
    grid = (pl.cdiv(B, TB),)             # non-divisible tail handled by Pallas

    return pl.pallas_call(
        mlp_kernel,
        out_shape=jax.ShapeDtypeStruct((B, D_OUT), jnp.float32),
        grid_spec=pltpu.PrefetchScalarGridSpec(
            num_scalar_prefetch=0,
            grid=grid,
            in_specs=[
                pl.BlockSpec((TB, D_IN), lambda i: (i, 0)),           # x: tiled
                pl.BlockSpec((D_IN, D_HID_PAD), lambda i: (0, 0)),    # w1: invariant
                pl.BlockSpec((1, D_HID_PAD), lambda i: (0, 0)),       # b1: invariant
                pl.BlockSpec((D_HID_PAD, D_OUT), lambda i: (0, 0)),   # w2: invariant
                pl.BlockSpec((1, D_OUT), lambda i: (0, 0)),           # b2: invariant
            ],
            out_specs=pl.BlockSpec((TB, D_OUT), lambda i: (i, 0)),
        ),
        compiler_params=pltpu.CompilerParams(
            dimension_semantics=("parallel",)),   # batch tiles are independent
    )(x, w1p, b1p, w2p, b2p)


if __name__ == "__main__":
    key = jax.random.PRNGKey(0)
    k_x, k_w1, k_b1, k_w2, k_b2 = jax.random.split(key, 5)

    B = 16
    x = jax.random.normal(k_x, (B, D_IN), dtype=jnp.float32)

    # torch.nn.Linear-style uniform init (f32 "master" weights).
    bound1 = 1.0 / (D_IN ** 0.5)
    bound2 = 1.0 / (D_HID ** 0.5)
    w1 = jax.random.uniform(k_w1, (D_IN, D_HID), jnp.float32, -bound1, bound1)
    b1 = jax.random.uniform(k_b1, (1, D_HID), jnp.float32, -bound1, bound1)
    w2 = jax.random.uniform(k_w2, (D_HID, D_OUT), jnp.float32, -bound2, bound2)
    b2 = jax.random.uniform(k_b2, (1, D_OUT), jnp.float32, -bound2, bound2)

    w1p, b1p, w2p, b2p = prepare_params(w1, b1, w2, b2)

    # Use a small tile (TB=8) so the grid has 2 batch blocks and the tiled /
    # pipelined path is exercised even at this toy batch size.
    out = mlp_forward(x, w1p, b1p, w2p, b2p, tb=8)
    jax.block_until_ready(out)
    assert out.shape == (B, D_OUT)

    # Reference in plain JAX using the same bf16-quantized operands the kernel
    # sees (f32 accumulation), so only MXU rounding differences remain.
    xq = x.astype(jnp.bfloat16).astype(jnp.float32)
    w1q = w1p.astype(jnp.float32)
    w2q = w2p.astype(jnp.float32)
    h_ref = jnp.maximum(xq @ w1q + b1p, 0.0)
    ref = h_ref.astype(jnp.bfloat16).astype(jnp.float32) @ w2q + b2p

    assert jnp.allclose(out, ref, atol=2e-2, rtol=2e-2), (
        float(jnp.max(jnp.abs(out - ref))))

    print("KERNEL_OK")
</pallas_src>

<mosaic_0001>
module attributes {stable_mosaic.version = 11 : i64} {
  func.func @mlp_kernel(%arg0: i32, %arg1: memref<8x640xf32, #tpu.memory_space<vmem>>, %arg2: memref<640x128xbf16, #tpu.memory_space<vmem>>, %arg3: memref<1x128xf32, #tpu.memory_space<vmem>>, %arg4: memref<128x640xbf16, #tpu.memory_space<vmem>>, %arg5: memref<1x640xf32, #tpu.memory_space<vmem>>, %arg6: memref<8x640xf32, #tpu.memory_space<vmem>>) attributes {dimension_semantics = [#tpu.dimension_semantics<parallel>], iteration_bounds = array<i64: 2>, scalar_prefetch = 0 : i64, scratch_operands = 0 : i64, tpu.core_type = #tpu.core_type<tc>, window_params = [{transform_indices = @transform_0, window_bounds = array<i64: 8, 640>}, {pipeline_mode = #tpu.pipeline_mode<synchronous>, transform_indices = @transform_1, window_bounds = array<i64: 640, 128>}, {pipeline_mode = #tpu.pipeline_mode<synchronous>, transform_indices = @transform_2, window_bounds = array<i64: 1, 128>}, {pipeline_mode = #tpu.pipeline_mode<synchronous>, transform_indices = @transform_3, window_bounds = array<i64: 128, 640>}, {pipeline_mode = #tpu.pipeline_mode<synchronous>, transform_indices = @transform_4, window_bounds = array<i64: 1, 640>}, {transform_indices = @transform_5, window_bounds = array<i64: 8, 640>}]} {
    %c0 = arith.constant 0 : index
    %c0_0 = arith.constant 0 : index
    %0 = vector.load %arg1[%c0, %c0_0] : memref<8x640xf32, #tpu.memory_space<vmem>>, vector<8x640xf32>
    %1 = arith.truncf %0 : vector<8x640xf32> to vector<8x640xbf16>
    %c0_1 = arith.constant 0 : index
    %c0_2 = arith.constant 0 : index
    %2 = vector.load %arg2[%c0_1, %c0_2] : memref<640x128xbf16, #tpu.memory_space<vmem>>, vector<640x128xbf16>
    %cst = arith.constant dense<0.000000e+00> : vector<8x128xf32>
    %3 = tpu.matmul %1, %2, %cst {dimension_numbers = #tpu.dot_dimension_numbers<[1], [0], [0], [1], [0, 0, 1, 1], [], []>} : vector<8x640xbf16>, vector<640x128xbf16>, vector<8x128xf32> -> vector<8x128xf32>
    %c0_3 = arith.constant 0 : index
    %c0_4 = arith.constant 0 : index
    %4 = vector.load %arg3[%c0_3, %c0_4] : memref<1x128xf32, #tpu.memory_space<vmem>>, vector<1x128xf32>
    %5 = vector.broadcast %4 : vector<1x128xf32> to vector<8x128xf32>
    %6 = arith.addf %3, %5 : vector<8x128xf32>
    %cst_5 = arith.constant 0.000000e+00 : f32
    %7 = vector.broadcast %cst_5 : f32 to vector<8x128xf32>
    %8 = arith.maximumf %6, %7 : vector<8x128xf32>
    %9 = arith.truncf %8 : vector<8x128xf32> to vector<8x128xbf16>
    %c0_6 = arith.constant 0 : index
    %c0_7 = arith.constant 0 : index
    %10 = vector.load %arg4[%c0_6, %c0_7] : memref<128x640xbf16, #tpu.memory_space<vmem>>, vector<128x640xbf16>
    %cst_8 = arith.constant dense<0.000000e+00> : vector<8x640xf32>
    %11 = tpu.matmul %9, %10, %cst_8 {dimension_numbers = #tpu.dot_dimension_numbers<[1], [0], [0], [1], [0, 0, 1, 1], [], []>} : vector<8x128xbf16>, vector<128x640xbf16>, vector<8x640xf32> -> vector<8x640xf32>
    %c0_9 = arith.constant 0 : index
    %c0_10 = arith.constant 0 : index
    %12 = vector.load %arg5[%c0_9, %c0_10] : memref<1x640xf32, #tpu.memory_space<vmem>>, vector<1x640xf32>
    %13 = vector.broadcast %12 : vector<1x640xf32> to vector<8x640xf32>
    %14 = arith.addf %11, %13 : vector<8x640xf32>
    %c0_11 = arith.constant 0 : index
    %c0_12 = arith.constant 0 : index
    %15 = vector.load %arg6[%c0_11, %c0_12] : memref<8x640xf32, #tpu.memory_space<vmem>>, vector<8x640xf32>
    tpu.vector_store %arg6[%c0_11, %c0_12], %14 {strides = array<i32>} : memref<8x640xf32, #tpu.memory_space<vmem>>, vector<8x640xf32>,
    return
  }
  func.func @transform_0(%arg0: i32) -> (i32, i32) {
    %c0_i32 = arith.constant 0 : i32
    %c0_i32_0 = arith.constant 0 : i32
    return %arg0, %c0_i32 : i32, i32
  }
  func.func @transform_1(%arg0: i32) -> (i32, i32) {
    %c0_i32 = arith.constant 0 : i32
    %c0_i32_0 = arith.constant 0 : i32
    %c0_i32_1 = arith.constant 0 : i32
    return %c0_i32, %c0_i32_0 : i32, i32
  }
  func.func @transform_2(%arg0: i32) -> (i32, i32) {
    %c0_i32 = arith.constant 0 : i32
    %c0_i32_0 = arith.constant 0 : i32
    %c0_i32_1 = arith.constant 0 : i32
    return %c0_i32, %c0_i32_0 : i32, i32
  }
  func.func @transform_3(%arg0: i32) -> (i32, i32) {
    %c0_i32 = arith.constant 0 : i32
    %c0_i32_0 = arith.constant 0 : i32
    %c0_i32_1 = arith.constant 0 : i32
    return %c0_i32, %c0_i32_0 : i32, i32
  }
  func.func @transform_4(%arg0: i32) -> (i32, i32) {
    %c0_i32 = arith.constant 0 : i32
    %c0_i32_0 = arith.constant 0 : i32
    %c0_i32_1 = arith.constant 0 : i32
    return %c0_i32, %c0_i32_0 : i32, i32
  }
  func.func @transform_5(%arg0: i32) -> (i32, i32) {
    %c0_i32 = arith.constant 0 : i32
    %c0_i32_0 = arith.constant 0 : i32
    return %arg0, %c0_i32 : i32, i32
  }
}

</mosaic_0001>

<llo_original>
// kernel: mlp_forward.1
$region0: #{mlp_forward.1}
  #allocation0 [shape = 'u32[]', space=smem, size = 0x4, offset = 0x4, fixed_abs, tag = 'smem constant byte address 0x4 - core index']
  #allocation1 [shape = 'u32[72,128]{1,0:T(1,128)}', space=vmem, size = 0x9000, scoped, tag = 'internal scratch']
  %s0 = inlined_call_operand.hbm [shape: f32[16,640], index: 0, kind: input, shape index: {}]
  %s1 = inlined_call_operand.hbm [shape: bf16[640,128], index: 1, kind: input, shape index: {}]
  %s2 = inlined_call_operand.vmem [shape: f32[1,128], index: 2, kind: input, shape index: {}]
  %s3 = inlined_call_operand.hbm [shape: bf16[128,640], index: 3, kind: input, shape index: {}]
  %s4 = inlined_call_operand.hbm [shape: f32[1,640], index: 4, kind: input, shape index: {}]
  %s5 = inlined_call_operand.hbm [shape: f32[16,640], index: 5, kind: output, shape index: {}]
  %s6 = sld [smem:[#allocation0]]
  $region69: #{mlp_forward.1} parent=0
    _
  %s8 = ssub.s32 1, %s6
  %s9 = scalar_select 0, %s8, %s6
  $region1: #{mlp_forward.1} parent=0
    #allocation2 [shape = 'u8[40960]{0}', space=vmem, size = 0xa000, scoped, tag = 'input window, operand 0']
    #allocation3 [shape = 's32[2]{0}', space=sflag, size = 0x8, scoped, tag = 'scoped memory for mlp_forward.1']
    #allocation4 [shape = 's32[2]{0}', space=sflag, size = 0x8, scoped, tag = 'scoped memory for mlp_forward.1']
    #allocation5 [shape = 'u8[163840]{0}', space=vmem, size = 0x28000, scoped, tag = 'input window, operand 1, single buffered']
    #allocation6 [shape = 's32[1]{0}', space=sflag, size = 0x4, scoped, tag = 'scoped memory for mlp_forward.1']
    #allocation7 [shape = 'u8[163840]{0}', space=vmem, size = 0x28000, scoped, tag = 'input window, operand 3, single buffered']
    #allocation8 [shape = 'u8[2560]{0}', space=vmem, size = 0xc00, scoped, tag = 'input window, operand 4, single buffered']
    #allocation9 [shape = 's32[1]{0}', space=sflag, size = 0x4, scoped, tag = 'scoped memory for mlp_forward.1']
    #allocation10 [shape = 'u8[40960]{0}', space=vmem, size = 0xa000, scoped, tag = 'output window, operand 0']
    %10 = vsyncpa [#allocation3], 0
    %s11 = scalar_lea.sflag [#allocation3], 1
    %12 = vsyncpa %s11, 0
    %13 = vsyncpa [#allocation6], 0
    %14 = vsyncpa [#allocation9], 0
    %15 = vsyncpa [#allocation4], 0
    %s16 = scalar_lea.sflag [#allocation4], 1
    %17 = vsyncpa %s16, 0
    loop: start=0, step=1, limit=4
    $region2: #{mlp_forward.1} parent=1 // loop_pre_header
      _
    $region3: #{mlp_forward.1} parent=1 // loop_header
      %s19 = sphi 0, %s23
      %p20 = scmp.ge.s32.totalorder %s19, 4
      %s29 = sphi 0, %s31
      %s32 = sphi 0, %s29
      %s33 = sphi 0, %s32
      %s49 = sphi 0, %s33
      %s53 = sphi 0, %s53
      %s55 = sphi 0, %s53
      %s56 = sphi 0, %s55
      %s70 = sphi 0, %s56
      %s74 = sphi 0, %s74
      %s76 = sphi 0, %s74
      %s77 = sphi 0, %s76
      %s91 = sphi 0, %s77
      %s95 = sphi 0, %s95
      %s97 = sphi 0, %s95
      %s98 = sphi 0, %s97
      %s112 = sphi 0, %s98
      %s116 = sphi 0, %s116
      %s118 = sphi 0, %s116
      %s119 = sphi 0, %s118
      %s133 = sphi 0, %s119
      %s139 = sphi 0, %s141
      %s142 = sphi 0, %s139
      %s143 = sphi 0, %s142
      %s159 = sphi 0, %s143
    $region4: #{mlp_forward.1} parent=1 // loop_header_branch
      %22 = sbr.rel (%p20) target = $region8
    $region5: #{mlp_forward.1} parent=1 // loop_body
      %s24 = ssub.s32 %s19, 1
      %s25 = ssub.s32 %s19, 2
      %s26 = sadd.s32 %s19, 1
      %s27 = ssub.s32 %s19, %s26
      %p28 = scmp.eq.s32.totalorder %s27, 0
      %s30 = sadd.s32 %s29, 1
      %s31 = scalar_select %p28, %s29, %s30
      %p34 = pneg %p28
      %p35 = scmp.eq.s32.totalorder %s19, 1
      %p36 = por %p34, %p35
      %p37 = scmp.ne.s32.totalorder %s29, %s32
      %p38 = scmp.eq.s32.totalorder %s19, 0
      %p39 = por %p37, %p38
      %p40 = scmp.ne.s32.totalorder %s29, %s32
      %p41 = scmp.eq.s32.totalorder %s24, 1
      %p42 = por %p40, %p41
      %p43 = scmp.ne.s32.totalorder %s32, %s33
      %p44 = scmp.eq.s32.totalorder %s24, 0
      %p45 = por %p43, %p44
      %p46 = scmp.ne.s32.totalorder %s32, %s33
      %p47 = scmp.eq.s32.totalorder %s25, 1
      %p48 = por %p46, %p47
      %p50 = scmp.ne.s32.totalorder %s33, %s49
      %p51 = scmp.eq.s32.totalorder %s25, 0
      %p52 = por %p50, %p51
      %s54 = sadd.s32 %s53, 1
      %p57 = scmp.eq.s32.totalorder %s19, 1
      %p58 = scmp.ne.s32.totalorder %s53, %s55
      %p59 = scmp.eq.s32.totalorder %s19, 0
      %p60 = por %p58, %p59
      %p61 = scmp.ne.s32.totalorder %s53, %s55
      %p62 = scmp.eq.s32.totalorder %s24, 1
      %p63 = por %p61, %p62
      %p64 = scmp.ne.s32.totalorder %s55, %s56
      %p65 = scmp.eq.s32.totalorder %s24, 0
      %p66 = por %p64, %p65
      %p67 = scmp.ne.s32.totalorder %s55, %s56
      %p68 = scmp.eq.s32.totalorder %s25, 1
      %p69 = por %p67, %p68
      %p71 = scmp.ne.s32.totalorder %s56, %s70
      %p72 = scmp.eq.s32.totalorder %s25, 0
      %p73 = por %p71, %p72
      %s75 = sadd.s32 %s74, 1
      %p78 = scmp.eq.s32.totalorder %s19, 1
      %p79 = scmp.ne.s32.totalorder %s74, %s76
      %p80 = scmp.eq.s32.totalorder %s19, 0
      %p81 = por %p79, %p80
      %p82 = scmp.ne.s32.totalorder %s74, %s76
      %p83 = scmp.eq.s32.totalorder %s24, 1
      %p84 = por %p82, %p83
      %p85 = scmp.ne.s32.totalorder %s76, %s77
      %p86 = scmp.eq.s32.totalorder %s24, 0
      %p87 = por %p85, %p86
      %p88 = scmp.ne.s32.totalorder %s76, %s77
      %p89 = scmp.eq.s32.totalorder %s25, 1
      %p90 = por %p88, %p89
      %p92 = scmp.ne.s32.totalorder %s77, %s91
      %p93 = scmp.eq.s32.totalorder %s25, 0
      %p94 = por %p92, %p93
      %s96 = sadd.s32 %s95, 1
      %p99 = scmp.eq.s32.totalorder %s19, 1
      %p100 = scmp.ne.s32.totalorder %s95, %s97
      %p101 = scmp.eq.s32.totalorder %s19, 0
      %p102 = por %p100, %p101
      %p103 = scmp.ne.s32.totalorder %s95, %s97
      %p104 = scmp.eq.s32.totalorder %s24, 1
      %p105 = por %p103, %p104
      %p106 = scmp.ne.s32.totalorder %s97, %s98
      %p107 = scmp.eq.s32.totalorder %s24, 0
      %p108 = por %p106, %p107
      %p109 = scmp.ne.s32.totalorder %s97, %s98
      %p110 = scmp.eq.s32.totalorder %s25, 1
      %p111 = por %p109, %p110
      %p113 = scmp.ne.s32.totalorder %s98, %s112
      %p114 = scmp.eq.s32.totalorder %s25, 0
      %p115 = por %p113, %p114
      %s117 = sadd.s32 %s116, 1
      %p120 = scmp.eq.s32.totalorder %s19, 1
      %p121 = scmp.ne.s32.totalorder %s116, %s118
      %p122 = scmp.eq.s32.totalorder %s19, 0
      %p123 = por %p121, %p122
      %p124 = scmp.ne.s32.totalorder %s116, %s118
      %p125 = scmp.eq.s32.totalorder %s24, 1
      %p126 = por %p124, %p125
      %p127 = scmp.ne.s32.totalorder %s118, %s119
      %p128 = scmp.eq.s32.totalorder %s24, 0
      %p129 = por %p127, %p128
      %p130 = scmp.ne.s32.totalorder %s118, %s119
      %p131 = scmp.eq.s32.totalorder %s25, 1
      %p132 = por %p130, %p131
      %p134 = scmp.ne.s32.totalorder %s119, %s133
      %p135 = scmp.eq.s32.totalorder %s25, 0
      %p136 = por %p134, %p135
      %s137 = ssub.s32 %s19, %s26
      %p138 = scmp.eq.s32.totalorder %s137, 0
      %s140 = sadd.s32 %s139, 1
      %s141 = scalar_select %p138, %s139, %s140
      %p144 = pneg %p138
      %p145 = scmp.eq.s32.totalorder %s19, 1
      %p146 = por %p144, %p145
      %p147 = scmp.ne.s32.totalorder %s139, %s142
      %p148 = scmp.eq.s32.totalorder %s19, 0
      %p149 = por %p147, %p148
      %p150 = scmp.ne.s32.totalorder %s139, %s142
      %p151 = scmp.eq.s32.totalorder %s24, 1
      %p152 = por %p150, %p151
      %p153 = scmp.ne.s32.totalorder %s142, %s143
      %p154 = scmp.eq.s32.totalorder %s24, 0
      %p155 = por %p153, %p154
      %p156 = scmp.ne.s32.totalorder %s142, %s143
      %p157 = scmp.eq.s32.totalorder %s25, 1
      %p158 = por %p156, %p157
      %p160 = scmp.ne.s32.totalorder %s143, %s159
      %p161 = scmp.eq.s32.totalorder %s25, 0
      %p162 = por %p160, %p161
      %p163 = scmp.le.s32.totalorder 1, %s19
      %p164 = scmp.lt.s32.totalorder %s19, 3
      %p165 = pnand %p163, %p164
      %p166 = pneg %p165
      // Predicated region
      $region9: #{mlp_forward.1} parent=5 // pred_check
        _
      $region10: #{mlp_forward.1} parent=5 // pred_check_branch
        %168 = sbr.rel (%p165) target = $region12
      $region11: #{mlp_forward.1} parent=5 // pred_region
        %s169 = ssub.s32 %s19, 1
        // Predicated region
        $region13: #{mlp_forward.1} parent=11 // pred_check
          %p170 = pneg %p66
        $region14: #{mlp_forward.1} parent=11 // pred_check_branch
          %172 = sbr.rel (%p170) target = $region16
        $region15: #{mlp_forward.1} parent=11 // pred_region
          %174 = vsyncadd [#allocation6], 0
          %s175 = sshll.u32 %s1, 4
          %s176 = int_to_ptr.hbm [resolvable:$true] %s175
          %s177 = sshll.u32 [#allocation5], 4
          %s178 = int_to_ptr.vmem [resolvable:$true] %s177
          %183 = dma.hbm_to_vmem [thread:$0]  %s176, 5120, %s178, [#allocation6], 64, 64, 4
        $region16: #{mlp_forward.1} parent=11 // pred_fallthru
          _
        // Predicated region
        $region17: #{mlp_forward.1} parent=11 // pred_check
          %p184 = pneg %p87
        $region18: #{mlp_forward.1} parent=11 // pred_check_branch
          %186 = sbr.rel (%p184) target = $region20
        $region19: #{mlp_forward.1} parent=11 // pred_region
          _
        $region20: #{mlp_forward.1} parent=11 // pred_fallthru
          _
        // Predicated region
        $region21: #{mlp_forward.1} parent=11 // pred_check
          %p187 = pneg %p108
        $region22: #{mlp_forward.1} parent=11 // pred_check_branch
          %189 = sbr.rel (%p187) target = $region24
        $region23: #{mlp_forward.1} parent=11 // pred_region
          %191 = vsyncadd [#allocation6], 0
          %s192 = sshll.u32 %s3, 4
          %s193 = int_to_ptr.hbm [resolvable:$true] %s192
          %s194 = sshll.u32 [#allocation7], 4
          %s195 = int_to_ptr.vmem [resolvable:$true] %s194
          %200 = dma.hbm_to_vmem [thread:$0]  %s193, 5120, %s195, [#allocation6], 320, 320, 20
        $region24: #{mlp_forward.1} parent=11 // pred_fallthru
          _
        // Predicated region
        $region25: #{mlp_forward.1} parent=11 // pred_check
          %p201 = pneg %p129
        $region26: #{mlp_forward.1} parent=11 // pred_check_branch
          %203 = sbr.rel (%p201) target = $region28
        $region27: #{mlp_forward.1} parent=11 // pred_region
          %205 = vsyncadd [#allocation9], 0
          %s207 = sshll.u32 %s4, 4
          %s208 = int_to_ptr.hbm [resolvable:$true] %s207
          %s209 = sshll.u32 [#allocation8], 4
          %s210 = int_to_ptr.vmem [resolvable:$true] %s209
          %212 = dma.hbm_to_vmem [thread:$0]  %s208, 80, %s210, [#allocation9]
        $region28: #{mlp_forward.1} parent=11 // pred_fallthru
          _
      $region12: #{mlp_forward.1} parent=5 // pred_fallthru
        _
      %p213 = scmp.lt.s32.totalorder %s19, 2
      // Predicated region
      $region29: #{mlp_forward.1} parent=5 // pred_check
        %p214 = pneg %p213
      $region30: #{mlp_forward.1} parent=5 // pred_check_branch
        %216 = sbr.rel (%p214) target = $region32
      $region31: #{mlp_forward.1} parent=5 // pred_region
        // Predicated region
        $region33: #{mlp_forward.1} parent=31 // pred_check
          %p217 = pneg %p39
        $region34: #{mlp_forward.1} parent=31 // pred_check_branch
          %219 = sbr.rel (%p217) target = $region36
        $region35: #{mlp_forward.1} parent=31 // pred_region
          %s220 = sand.u32 %s29, 1
          %s221 = scalar_lea.sflag [#allocation3], %s220
          %s222 = sand.u32 %s29, 1
          %s223 = smul.addr %s222, 40
          %s224 = scalar_lea.vmem [#allocation2], %s223
          %226 = vsyncadd %s221, 0
          %s227 = smul.addr %s19, 5
          %s228 = smul.addr %s227, 8
          %s229 = scalar_lea.hbm %s0, %s228
          %s231 = sshll.u32 %s229, 4
          %s232 = int_to_ptr.hbm [resolvable:$true] %s231
          %s233 = sshll.u32 %s224, 4
          %s234 = int_to_ptr.vmem [resolvable:$true] %s233
          %236 = dma.hbm_to_vmem [thread:$0]  %s232, 640, %s234, %s221
        $region36: #{mlp_forward.1} parent=31 // pred_fallthru
          _
      $region32: #{mlp_forward.1} parent=5 // pred_fallthru
        _
      %p237 = scmp.le.s32.totalorder 1, %s19
      %p238 = scmp.lt.s32.totalorder %s19, 3
      %p239 = pnand %p237, %p238
      %p240 = pneg %p239
      // Predicated region
      $region37: #{mlp_forward.1} parent=5 // pred_check
        _
      $region38: #{mlp_forward.1} parent=5 // pred_check_branch
        %242 = sbr.rel (%p239) target = $region40
      $region39: #{mlp_forward.1} parent=5 // pred_region
        %s243 = ssub.s32 %s19, 1
        %s244 = sand.u32 %s32, 1
        %s245 = scalar_lea.sflag [#allocation3], %s244
        %s246 = sand.u32 %s32, 1
        %s247 = smul.addr %s246, 40
        %s248 = scalar_lea.vmem [#allocation2], %s247
        // Predicated region
        $region41: #{mlp_forward.1} parent=39 // pred_check
          %p249 = pneg %p45
        $region42: #{mlp_forward.1} parent=39 // pred_check_branch
          %251 = sbr.rel (%p249) target = $region44
        $region43: #{mlp_forward.1} parent=39 // pred_region
          %253 = dma.done %s245, 640
        $region44: #{mlp_forward.1} parent=39 // pred_fallthru
          _
        // Predicated region
        $region45: #{mlp_forward.1} parent=39 // pred_check
          %p254 = pneg %p66
        $region46: #{mlp_forward.1} parent=39 // pred_check_branch
          %256 = sbr.rel (%p254) target = $region48
        $region47: #{mlp_forward.1} parent=39 // pred_region
          %258 = dma.done [#allocation6], 5120
        $region48: #{mlp_forward.1} parent=39 // pred_fallthru
          _
        // Predicated region
        $region49: #{mlp_forward.1} parent=39 // pred_check
          %p259 = pneg %p108
        $region50: #{mlp_forward.1} parent=39 // pred_check_branch
          %261 = sbr.rel (%p259) target = $region52
        $region51: #{mlp_forward.1} parent=39 // pred_region
          %263 = dma.done [#allocation6], 5120
        $region52: #{mlp_forward.1} parent=39 // pred_fallthru
          _
        // Predicated region
        $region53: #{mlp_forward.1} parent=39 // pred_check
          %p264 = pneg %p129
        $region54: #{mlp_forward.1} parent=39 // pred_check_branch
          %266 = sbr.rel (%p264) target = $region56
        $region55: #{mlp_forward.1} parent=39 // pred_region
          %268 = dma.done [#allocation9], 80
        $region56: #{mlp_forward.1} parent=39 // pred_fallthru
          _
        %s269 = sand.u32 %s32, 1
        %s270 = scalar_lea.sflag [#allocation3], %s269
        %s271 = sand.u32 %s32, 1
        %s272 = smul.addr %s271, 40
        %s273 = scalar_lea.vmem [#allocation2], %s272
        %p274 = pneg %p45
        %p275 = pneg %p42
        %p276 = pneg %p66
        %p277 = pneg %p63
        %p278 = pneg %p87
        %p279 = pneg %p84
        %p280 = pneg %p108
        %p281 = pneg %p105
        %p282 = pneg %p129
        %p283 = pneg %p126
        %p284 = pneg %p155
        %p285 = pneg %p152
        %s286 = sand.u32 %s142, 1
        %s287 = scalar_lea.sflag [#allocation4], %s286
        %s288 = sand.u32 %s142, 1
        %s289 = smul.addr %s288, 40
        %s290 = scalar_lea.vmem [#allocation10], %s289
        %v291 = vld [vmem:[%s248] sm:$0xff]
        %v292 = vld [vmem:[%s248 + $0x8] sm:$0xff]
        %v293 = vld [vmem:[%s248 + $0x10] sm:$0xff]
        %v294 = vld [vmem:[%s248 + $0x18] sm:$0xff]
        %v295 = vld [vmem:[%s248 + $0x20] sm:$0xff]
        %v296 = vpack.c.bf16 %v291, %v291
        %v297 = vpack.c.bf16 %v292, %v292
        %v298 = vpack.c.bf16 %v293, %v293
        %v299 = vpack.c.bf16 %v294, %v294
        %v300 = vpack.c.bf16 %v295, %v295
        %v301 = vld [vmem:[#allocation5] sm:$0xf]
        %v302 = vld [vmem:[#allocation5 + $0x4] sm:$0xf]
        %v303 = vld [vmem:[#allocation5 + $0x8] sm:$0xf]
        %v304 = vld [vmem:[#allocation5 + $0xc] sm:$0xf]
        %v305 = vld [vmem:[#allocation5 + $0x10] sm:$0xf]
        %v306 = vld [vmem:[#allocation5 + $0x14] sm:$0xf]
        %v307 = vld [vmem:[#allocation5 + $0x18] sm:$0xf]
        %v308 = vld [vmem:[#allocation5 + $0x1c] sm:$0xf]
        %v309 = vld [vmem:[#allocation5 + $0x20] sm:$0xf]
        %v310 = vld [vmem:[#allocation5 + $0x24] sm:$0xf]
        %v311 = vld [vmem:[#allocation5 + $0x28] sm:$0xf]
        %v312 = vld [vmem:[#allocation5 + $0x2c] sm:$0xf]
        %v313 = vld [vmem:[#allocation5 + $0x30] sm:$0xf]
        %v314 = vld [vmem:[#allocation5 + $0x34] sm:$0xf]
        %v315 = vld [vmem:[#allocation5 + $0x38] sm:$0xf]
        %v316 = vld [vmem:[#allocation5 + $0x3c] sm:$0xf]
        %v317 = vld [vmem:[#allocation5 + $0x40] sm:$0xf]
        %v318 = vld [vmem:[#allocation5 + $0x44] sm:$0xf]
        %v319 = vld [vmem:[#allocation5 + $0x48] sm:$0xf]
        %v320 = vld [vmem:[#allocation5 + $0x4c] sm:$0xf]
        %v321 = vld [vmem:[#allocation5 + $0x50] sm:$0xf]
        %v322 = vld [vmem:[#allocation5 + $0x54] sm:$0xf]
        %v323 = vld [vmem:[#allocation5 + $0x58] sm:$0xf]
        %v324 = vld [vmem:[#allocation5 + $0x5c] sm:$0xf]
        %v325 = vld [vmem:[#allocation5 + $0x60] sm:$0xf]
        %v326 = vld [vmem:[#allocation5 + $0x64] sm:$0xf]
        %v327 = vld [vmem:[#allocation5 + $0x68] sm:$0xf]
        %v328 = vld [vmem:[#allocation5 + $0x6c] sm:$0xf]
        %v329 = vld [vmem:[#allocation5 + $0x70] sm:$0xf]
        %v330 = vld [vmem:[#allocation5 + $0x74] sm:$0xf]
        %v331 = vld [vmem:[#allocation5 + $0x78] sm:$0xf]
        %v332 = vld [vmem:[#allocation5 + $0x7c] sm:$0xf]
        %v333 = vld [vmem:[#allocation5 + $0x80] sm:$0xf]
        %v334 = vld [vmem:[#allocation5 + $0x84] sm:$0xf]
        %v335 = vld [vmem:[#allocation5 + $0x88] sm:$0xf]
        %v336 = vld [vmem:[#allocation5 + $0x8c] sm:$0xf]
        %v337 = vld [vmem:[#allocation5 + $0x90] sm:$0xf]
        %v338 = vld [vmem:[#allocation5 + $0x94] sm:$0xf]
        %v339 = vld [vmem:[#allocation5 + $0x98] sm:$0xf]
        %v340 = vld [vmem:[#allocation5 + $0x9c] sm:$0xf]
        %v341 = vld [vmem:[#allocation5 + $0xa0] sm:$0xf]
        %v342 = vld [vmem:[#allocation5 + $0xa4] sm:$0xf]
        %v343 = vld [vmem:[#allocation5 + $0xa8] sm:$0xf]
        %v344 = vld [vmem:[#allocation5 + $0xac] sm:$0xf]
        %v345 = vld [vmem:[#allocation5 + $0xb0] sm:$0xf]
        %v346 = vld [vmem:[#allocation5 + $0xb4] sm:$0xf]
        %v347 = vld [vmem:[#allocation5 + $0xb8] sm:$0xf]
        %v348 = vld [vmem:[#allocation5 + $0xbc] sm:$0xf]
        %v349 = vld [vmem:[#allocation5 + $0xc0] sm:$0xf]
        %v350 = vld [vmem:[#allocation5 + $0xc4] sm:$0xf]
        %v351 = vld [vmem:[#allocation5 + $0xc8] sm:$0xf]
        %v352 = vld [vmem:[#allocation5 + $0xcc] sm:$0xf]
        %v353 = vld [vmem:[#allocation5 + $0xd0] sm:$0xf]
        %v354 = vld [vmem:[#allocation5 + $0xd4] sm:$0xf]
        %v355 = vld [vmem:[#allocation5 + $0xd8] sm:$0xf]
        %v356 = vld [vmem:[#allocation5 + $0xdc] sm:$0xf]
        %v357 = vld [vmem:[#allocation5 + $0xe0] sm:$0xf]
        %v358 = vld [vmem:[#allocation5 + $0xe4] sm:$0xf]
        %v359 = vld [vmem:[#allocation5 + $0xe8] sm:$0xf]
        %v360 = vld [vmem:[#allocation5 + $0xec] sm:$0xf]
        %v361 = vld [vmem:[#allocation5 + $0xf0] sm:$0xf]
        %v362 = vld [vmem:[#allocation5 + $0xf4] sm:$0xf]
        %v363 = vld [vmem:[#allocation5 + $0xf8] sm:$0xf]
        %v364 = vld [vmem:[#allocation5 + $0xfc] sm:$0xf]
        %v365 = vld [vmem:[#allocation5 + $0x100] sm:$0xf]
        %v366 = vld [vmem:[#allocation5 + $0x104] sm:$0xf]
        %v367 = vld [vmem:[#allocation5 + $0x108] sm:$0xf]
        %v368 = vld [vmem:[#allocation5 + $0x10c] sm:$0xf]
        %v369 = vld [vmem:[#allocation5 + $0x110] sm:$0xf]
        %v370 = vld [vmem:[#allocation5 + $0x114] sm:$0xf]
        %v371 = vld [vmem:[#allocation5 + $0x118] sm:$0xf]
        %v372 = vld [vmem:[#allocation5 + $0x11c] sm:$0xf]
        %v373 = vld [vmem:[#allocation5 + $0x120] sm:$0xf]
        %v374 = vld [vmem:[#allocation5 + $0x124] sm:$0xf]
        %v375 = vld [vmem:[#allocation5 + $0x128] sm:$0xf]
        %v376 = vld [vmem:[#allocation5 + $0x12c] sm:$0xf]
        %v377 = vld [vmem:[#allocation5 + $0x130] sm:$0xf]
        %v378 = vld [vmem:[#allocation5 + $0x134] sm:$0xf]
        %v379 = vld [vmem:[#allocation5 + $0x138] sm:$0xf]
        %v380 = vld [vmem:[#allocation5 + $0x13c] sm:$0xf]
        %v381 = vld [vmem:[%s2] sm:$0x1]
        %v383 = vperm.slane %v381, 0
        %v465 = vunpack.c.l.b16 %v301
        %v466 = vunpack.c.l.b16 %v302
        %v467 = vunpack.c.l.b16 %v303
        %v468 = vunpack.c.l.b16 %v304
        %v469 = vunpack.c.l.b16 %v305
        %v470 = vunpack.c.l.b16 %v306
        %v471 = vunpack.c.l.b16 %v307
        %v472 = vunpack.c.l.b16 %v308
        %v473 = vunpack.c.l.b16 %v309
        %v474 = vunpack.c.l.b16 %v310
        %v475 = vunpack.c.l.b16 %v311
        %v476 = vunpack.c.l.b16 %v312
        %v477 = vunpack.c.l.b16 %v313
        %v478 = vunpack.c.l.b16 %v314
        %v479 = vunpack.c.l.b16 %v315
        %v480 = vunpack.c.l.b16 %v316
        %v481 = vunpack.c.l.b16 %v317
        %v482 = vunpack.c.l.b16 %v318
        %v483 = vunpack.c.l.b16 %v319
        %v484 = vunpack.c.l.b16 %v320
        %v485 = vunpack.c.l.b16 %v321
        %v486 = vunpack.c.l.b16 %v322
        %v487 = vunpack.c.l.b16 %v323
        %v488 = vunpack.c.l.b16 %v324
        %v489 = vunpack.c.l.b16 %v325
        %v490 = vunpack.c.l.b16 %v326
        %v491 = vunpack.c.l.b16 %v327
        %v492 = vunpack.c.l.b16 %v328
        %v493 = vunpack.c.l.b16 %v329
        %v494 = vunpack.c.l.b16 %v330
        %v495 = vunpack.c.l.b16 %v331
        %v496 = vunpack.c.l.b16 %v332
        %v497 = vunpack.c.l.b16 %v333
        %v498 = vunpack.c.l.b16 %v334
        %v499 = vunpack.c.l.b16 %v335
        %v500 = vunpack.c.l.b16 %v336
        %v501 = vunpack.c.l.b16 %v337
        %v502 = vunpack.c.l.b16 %v338
        %v503 = vunpack.c.l.b16 %v339
        %v504 = vunpack.c.l.b16 %v340
        %v505 = vunpack.c.l.b16 %v341
        %v506 = vunpack.c.l.b16 %v342
        %v507 = vunpack.c.l.b16 %v343
        %v508 = vunpack.c.l.b16 %v344
        %v509 = vunpack.c.l.b16 %v345
        %v510 = vunpack.c.l.b16 %v346
        %v511 = vunpack.c.l.b16 %v347
        %v512 = vunpack.c.l.b16 %v348
        %v513 = vunpack.c.l.b16 %v349
        %v514 = vunpack.c.l.b16 %v350
        %v515 = vunpack.c.l.b16 %v351
        %v516 = vunpack.c.l.b16 %v352
        %v517 = vunpack.c.l.b16 %v353
        %v518 = vunpack.c.l.b16 %v354
        %v519 = vunpack.c.l.b16 %v355
        %v520 = vunpack.c.l.b16 %v356
        %v521 = vunpack.c.l.b16 %v357
        %v522 = vunpack.c.l.b16 %v358
        %v523 = vunpack.c.l.b16 %v359
        %v524 = vunpack.c.l.b16 %v360
        %v525 = vunpack.c.l.b16 %v361
        %v526 = vunpack.c.l.b16 %v362
        %v527 = vunpack.c.l.b16 %v363
        %v528 = vunpack.c.l.b16 %v364
        %v529 = vunpack.c.l.b16 %v365
        %v530 = vunpack.c.l.b16 %v366
        %v531 = vunpack.c.l.b16 %v367
        %v532 = vunpack.c.l.b16 %v368
        %v533 = vunpack.c.l.b16 %v369
        %v534 = vunpack.c.l.b16 %v370
        %v535 = vunpack.c.l.b16 %v371
        %v536 = vunpack.c.l.b16 %v372
        %v537 = vunpack.c.l.b16 %v373
        %v538 = vunpack.c.l.b16 %v374
        %v539 = vunpack.c.l.b16 %v375
        %v540 = vunpack.c.l.b16 %v376
        %v541 = vunpack.c.l.b16 %v377
        %v542 = vunpack.c.l.b16 %v378
        %v543 = vunpack.c.l.b16 %v379
        %v544 = vunpack.c.l.b16 %v380
        %v545 = vpack.c.b16 %v466, %v465
        %v546 = vpack.c.b16 %v468, %v467
        %v547 = vpack.c.b16 %v470, %v469
        %v548 = vpack.c.b16 %v472, %v471
        %v549 = vpack.c.b16 %v474, %v473
        %v550 = vpack.c.b16 %v476, %v475
        %v551 = vpack.c.b16 %v478, %v477
        %v552 = vpack.c.b16 %v480, %v479
        %v553 = vpack.c.b16 %v482, %v481
        %v554 = vpack.c.b16 %v484, %v483
        %v555 = vpack.c.b16 %v486, %v485
        %v556 = vpack.c.b16 %v488, %v487
        %v557 = vpack.c.b16 %v490, %v489
        %v558 = vpack.c.b16 %v492, %v491
        %v559 = vpack.c.b16 %v494, %v493
        %v560 = vpack.c.b16 %v496, %v495
        %v561 = vpack.c.b16 %v498, %v497
        %v562 = vpack.c.b16 %v500, %v499
        %v563 = vpack.c.b16 %v502, %v501
        %v564 = vpack.c.b16 %v504, %v503
        %v565 = vpack.c.b16 %v506, %v505
        %v566 = vpack.c.b16 %v508, %v507
        %v567 = vpack.c.b16 %v510, %v509
        %v568 = vpack.c.b16 %v512, %v511
        %v569 = vpack.c.b16 %v514, %v513
        %v570 = vpack.c.b16 %v516, %v515
        %v571 = vpack.c.b16 %v518, %v517
        %v572 = vpack.c.b16 %v520, %v519
        %v573 = vpack.c.b16 %v522, %v521
        %v574 = vpack.c.b16 %v524, %v523
        %v575 = vpack.c.b16 %v526, %v525
        %v576 = vpack.c.b16 %v528, %v527
        %v577 = vpack.c.b16 %v530, %v529
        %v578 = vpack.c.b16 %v532, %v531
        %v579 = vpack.c.b16 %v534, %v533
        %v580 = vpack.c.b16 %v536, %v535
        %v581 = vpack.c.b16 %v538, %v537
        %v582 = vpack.c.b16 %v540, %v539
        %v583 = vpack.c.b16 %v542, %v541
        %v584 = vpack.c.b16 %v544, %v543
        %625 = vmatpush.bf16.msra.mxu0 %v552
        %626 = vmatpush.bf16.msra.mxu0 %v551
        %627 = vmatpush.bf16.msra.mxu0 %v550
        %628 = vmatpush.bf16.msra.mxu0 %v549
        %629 = vmatpush.bf16.msra.mxu0 %v548
        %630 = vmatpush.bf16.msra.mxu0 %v547
        %631 = vmatpush.bf16.msra.mxu0 %v546
        %632 = vmatpush.bf16.msra.mxu0 %v545
        %633 = vmatmul.bf16.gmra.mxu0 %v296
        %v634 = vpop.f32.mrf.mxu0
        %v635 = vadd.f32 %v383, %v634
        %v636 = vpop.f32.mrf.mxu0
        %637 = vdwg.mxu0
        %638 = vmatpush.bf16.msra.mxu0 %v560
        %639 = vmatpush.bf16.msra.mxu0 %v559
        %640 = vmatpush.bf16.msra.mxu0 %v558
        %641 = vmatpush.bf16.msra.mxu0 %v557
        %642 = vmatpush.bf16.msra.mxu0 %v556
        %643 = vmatpush.bf16.msra.mxu0 %v555
        %644 = vmatpush.bf16.msra.mxu0 %v554
        %645 = vmatpush.bf16.msra.mxu0 %v553
        %646 = vmatmul.bf16.gmra.mxu0 %v297
        %v647 = vpop.f32.mrf.mxu0
        %v648 = vadd.f32 %v635, %v647
        %v649 = vpop.f32.mrf.mxu0
        %650 = vdwg.mxu0
        %651 = vmatpush.bf16.msra.mxu0 %v568
        %652 = vmatpush.bf16.msra.mxu0 %v567
        %653 = vmatpush.bf16.msra.mxu0 %v566
        %654 = vmatpush.bf16.msra.mxu0 %v565
        %655 = vmatpush.bf16.msra.mxu0 %v564
        %656 = vmatpush.bf16.msra.mxu0 %v563
        %657 = vmatpush.bf16.msra.mxu0 %v562
        %658 = vmatpush.bf16.msra.mxu0 %v561
        %659 = vmatmul.bf16.gmra.mxu0 %v298
        %v660 = vpop.f32.mrf.mxu0
        %v661 = vadd.f32 %v648, %v660
        %v662 = vpop.f32.mrf.mxu0
        %663 = vdwg.mxu0
        %664 = vmatpush.bf16.msra.mxu0 %v576
        %665 = vmatpush.bf16.msra.mxu0 %v575
        %666 = vmatpush.bf16.msra.mxu0 %v574
        %667 = vmatpush.bf16.msra.mxu0 %v573
        %668 = vmatpush.bf16.msra.mxu0 %v572
        %669 = vmatpush.bf16.msra.mxu0 %v571
        %670 = vmatpush.bf16.msra.mxu0 %v570
        %671 = vmatpush.bf16.msra.mxu0 %v569
        %672 = vmatmul.bf16.gmra.mxu0 %v299
        %v673 = vpop.f32.mrf.mxu0
        %v674 = vadd.f32 %v661, %v673
        %v675 = vpop.f32.mrf.mxu0
        %676 = vdwg.mxu0
        %677 = vmatpush.bf16.msra.mxu0 %v584
        %678 = vmatpush.bf16.msra.mxu0 %v583
        %679 = vmatpush.bf16.msra.mxu0 %v582
        %680 = vmatpush.bf16.msra.mxu0 %v581
        %681 = vmatpush.bf16.msra.mxu0 %v580
        %682 = vmatpush.bf16.msra.mxu0 %v579
        %683 = vmatpush.bf16.msra.mxu0 %v578
        %684 = vmatpush.bf16.msra.mxu0 %v577
        %685 = vmatmul.bf16.gmra.mxu0 %v300
        %v686 = vpop.f32.mrf.mxu0
        %v687 = vadd.f32 %v674, %v686
        %v688 = vpop.f32.mrf.mxu0
        %689 = vdwg.mxu0
        %v690 = vmax.f32 %v687, 0.0
        %v691 = vpack.c.bf16 %v690, %v690
        %v692 = vld [vmem:[#allocation7] sm:$0xff]
        %v693 = vld [vmem:[#allocation7 + $0x8] sm:$0xff]
        %v694 = vld [vmem:[#allocation7 + $0x10] sm:$0xf]
        %v695 = vld [vmem:[#allocation7 + $0x14] sm:$0xff]
        %v696 = vld [vmem:[#allocation7 + $0x1c] sm:$0xff]
        %v697 = vld [vmem:[#allocation7 + $0x24] sm:$0xf]
        %v698 = vld [vmem:[#allocation7 + $0x28] sm:$0xff]
        %v699 = vld [vmem:[#allocation7 + $0x30] sm:$0xff]
        %v700 = vld [vmem:[#allocation7 + $0x38] sm:$0xf]
        %v701 = vld [vmem:[#allocation7 + $0x3c] sm:$0xff]
        %v702 = vld [vmem:[#allocation7 + $0x44] sm:$0xff]
        %v703 = vld [vmem:[#allocation7 + $0x4c] sm:$0xf]
        %v704 = vld [vmem:[#allocation7 + $0x50] sm:$0xff]
        %v705 = vld [vmem:[#allocation7 + $0x58] sm:$0xff]
        %v706 = vld [vmem:[#allocation7 + $0x60] sm:$0xf]
        %v707 = vld [vmem:[#allocation7 + $0x64] sm:$0xff]
        %v708 = vld [vmem:[#allocation7 + $0x6c] sm:$0xff]
        %v709 = vld [vmem:[#allocation7 + $0x74] sm:$0xf]
        %v710 = vld [vmem:[#allocation7 + $0x78] sm:$0xff]
        %v711 = vld [vmem:[#allocation7 + $0x80] sm:$0xff]
        %v712 = vld [vmem:[#allocation7 + $0x88] sm:$0xf]
        %v713 = vld [vmem:[#allocation7 + $0x8c] sm:$0xff]
        %v714 = vld [vmem:[#allocation7 + $0x94] sm:$0xff]
        %v715 = vld [vmem:[#allocation7 + $0x9c] sm:$0xf]
        %v716 = vld [vmem:[#allocation7 + $0xa0] sm:$0xff]
        %v717 = vld [vmem:[#allocation7 + $0xa8] sm:$0xff]
        %v718 = vld [vmem:[#allocation7 + $0xb0] sm:$0xf]
        %v719 = vld [vmem:[#allocation7 + $0xb4] sm:$0xff]
        %v720 = vld [vmem:[#allocation7 + $0xbc] sm:$0xff]
        %v721 = vld [vmem:[#allocation7 + $0xc4] sm:$0xf]
        %v722 = vld [vmem:[#allocation7 + $0xc8] sm:$0xff]
        %v723 = vld [vmem:[#allocation7 + $0xd0] sm:$0xff]
        %v724 = vld [vmem:[#allocation7 + $0xd8] sm:$0xf]
        %v725 = vld [vmem:[#allocation7 + $0xdc] sm:$0xff]
        %v726 = vld [vmem:[#allocation7 + $0xe4] sm:$0xff]
        %v727 = vld [vmem:[#allocation7 + $0xec] sm:$0xf]
        %v728 = vld [vmem:[#allocation7 + $0xf0] sm:$0xff]
        %v729 = vld [vmem:[#allocation7 + $0xf8] sm:$0xff]
        %v730 = vld [vmem:[#allocation7 + $0x100] sm:$0xf]
        %v731 = vld [vmem:[#allocation7 + $0x104] sm:$0xff]
        %v732 = vld [vmem:[#allocation7 + $0x10c] sm:$0xff]
        %v733 = vld [vmem:[#allocation7 + $0x114] sm:$0xf]
        %v734 = vld [vmem:[#allocation7 + $0x118] sm:$0xff]
        %v735 = vld [vmem:[#allocation7 + $0x120] sm:$0xff]
        %v736 = vld [vmem:[#allocation7 + $0x128] sm:$0xf]
        %v737 = vld [vmem:[#allocation7 + $0x12c] sm:$0xff]
        %v738 = vld [vmem:[#allocation7 + $0x134] sm:$0xff]
        %v739 = vld [vmem:[#allocation7 + $0x13c] sm:$0xf]
        %v740 = vld [vmem:[#allocation8] sm:$0x1f]
        %v742 = vperm.slane %v740, 0
        %v743 = vperm.slane %v740, 1
        %v744 = vperm.slane %v740, 2
        %v745 = vperm.slane %v740, 3
        %v746 = vperm.slane %v740, 4
        %v800 = vunpack.c.l.b16 %v692
        %v801 = vunpack.c.h.b16 %v692
        %v802 = vunpack.c.l.b16 %v693
        %v803 = vunpack.c.h.b16 %v693
        %v804 = vunpack.c.l.b16 %v694
        %v805 = vunpack.c.l.b16 %v695
        %v806 = vunpack.c.h.b16 %v695
        %v807 = vunpack.c.l.b16 %v696
        %v808 = vunpack.c.h.b16 %v696
        %v809 = vunpack.c.l.b16 %v697
        %v810 = vunpack.c.l.b16 %v698
        %v811 = vunpack.c.h.b16 %v698
        %v812 = vunpack.c.l.b16 %v699
        %v813 = vunpack.c.h.b16 %v699
        %v814 = vunpack.c.l.b16 %v700
        %v815 = vunpack.c.l.b16 %v701
        %v816 = vunpack.c.h.b16 %v701
        %v817 = vunpack.c.l.b16 %v702
        %v818 = vunpack.c.h.b16 %v702
        %v819 = vunpack.c.l.b16 %v703
        %v820 = vunpack.c.l.b16 %v704
        %v821 = vunpack.c.h.b16 %v704
        %v822 = vunpack.c.l.b16 %v705
        %v823 = vunpack.c.h.b16 %v705
        %v824 = vunpack.c.l.b16 %v706
        %v825 = vunpack.c.l.b16 %v707
        %v826 = vunpack.c.h.b16 %v707
        %v827 = vunpack.c.l.b16 %v708
        %v828 = vunpack.c.h.b16 %v708
        %v829 = vunpack.c.l.b16 %v709
        %v830 = vunpack.c.l.b16 %v710
        %v831 = vunpack.c.h.b16 %v710
        %v832 = vunpack.c.l.b16 %v711
        %v833 = vunpack.c.h.b16 %v711
        %v834 = vunpack.c.l.b16 %v712
        %v835 = vunpack.c.l.b16 %v713
        %v836 = vunpack.c.h.b16 %v713
        %v837 = vunpack.c.l.b16 %v714
        %v838 = vunpack.c.h.b16 %v714
        %v839 = vunpack.c.l.b16 %v715
        %v840 = vunpack.c.l.b16 %v716
        %v841 = vunpack.c.h.b16 %v716
        %v842 = vunpack.c.l.b16 %v717
        %v843 = vunpack.c.h.b16 %v717
        %v844 = vunpack.c.l.b16 %v718
        %v845 = vunpack.c.l.b16 %v719
        %v846 = vunpack.c.h.b16 %v719
        %v847 = vunpack.c.l.b16 %v720
        %v848 = vunpack.c.h.b16 %v720
        %v849 = vunpack.c.l.b16 %v721
        %v850 = vunpack.c.l.b16 %v722
        %v851 = vunpack.c.h.b16 %v722
        %v852 = vunpack.c.l.b16 %v723
        %v853 = vunpack.c.h.b16 %v723
        %v854 = vunpack.c.l.b16 %v724
        %v855 = vunpack.c.l.b16 %v725
        %v856 = vunpack.c.h.b16 %v725
        %v857 = vunpack.c.l.b16 %v726
        %v858 = vunpack.c.h.b16 %v726
        %v859 = vunpack.c.l.b16 %v727
        %v860 = vunpack.c.l.b16 %v728
        %v861 = vunpack.c.h.b16 %v728
        %v862 = vunpack.c.l.b16 %v729
        %v863 = vunpack.c.h.b16 %v729
        %v864 = vunpack.c.l.b16 %v730
        %v865 = vunpack.c.l.b16 %v731
        %v866 = vunpack.c.h.b16 %v731
        %v867 = vunpack.c.l.b16 %v732
        %v868 = vunpack.c.h.b16 %v732
        %v869 = vunpack.c.l.b16 %v733
        %v870 = vunpack.c.l.b16 %v734
        %v871 = vunpack.c.h.b16 %v734
        %v872 = vunpack.c.l.b16 %v735
        %v873 = vunpack.c.h.b16 %v735
        %v874 = vunpack.c.l.b16 %v736
        %v875 = vunpack.c.l.b16 %v737
        %v876 = vunpack.c.h.b16 %v737
        %v877 = vunpack.c.l.b16 %v738
        %v878 = vunpack.c.h.b16 %v738
        %v879 = vunpack.c.l.b16 %v739
        %v880 = vpack.c.b16 %v805, %v800
        %v881 = vpack.c.b16 %v806, %v801
        %v882 = vpack.c.b16 %v807, %v802
        %v883 = vpack.c.b16 %v808, %v803
        %v884 = vpack.c.b16 %v809, %v804
        %v885 = vpack.c.b16 %v815, %v810
        %v886 = vpack.c.b16 %v816, %v811
        %v887 = vpack.c.b16 %v817, %v812
        %v888 = vpack.c.b16 %v818, %v813
        %v889 = vpack.c.b16 %v819, %v814
        %v890 = vpack.c.b16 %v825, %v820
        %v891 = vpack.c.b16 %v826, %v821
        %v892 = vpack.c.b16 %v827, %v822
        %v893 = vpack.c.b16 %v828, %v823
        %v894 = vpack.c.b16 %v829, %v824
        %v895 = vpack.c.b16 %v835, %v830
        %v896 = vpack.c.b16 %v836, %v831
        %v897 = vpack.c.b16 %v837, %v832
        %v898 = vpack.c.b16 %v838, %v833
        %v899 = vpack.c.b16 %v839, %v834
        %v900 = vpack.c.b16 %v845, %v840
        %v901 = vpack.c.b16 %v846, %v841
        %v902 = vpack.c.b16 %v847, %v842
        %v903 = vpack.c.b16 %v848, %v843
        %v904 = vpack.c.b16 %v849, %v844
        %v905 = vpack.c.b16 %v855, %v850
        %v906 = vpack.c.b16 %v856, %v851
        %v907 = vpack.c.b16 %v857, %v852
        %v908 = vpack.c.b16 %v858, %v853
        %v909 = vpack.c.b16 %v859, %v854
        %v910 = vpack.c.b16 %v865, %v860
        %v911 = vpack.c.b16 %v866, %v861
        %v912 = vpack.c.b16 %v867, %v862
        %v913 = vpack.c.b16 %v868, %v863
        %v914 = vpack.c.b16 %v869, %v864
        %v915 = vpack.c.b16 %v875, %v870
        %v916 = vpack.c.b16 %v876, %v871
        %v917 = vpack.c.b16 %v877, %v872
        %v918 = vpack.c.b16 %v878, %v873
        %v919 = vpack.c.b16 %v879, %v874
        %960 = vmatpush.bf16.msra.mxu0 %v915
        %961 = vmatpush.bf16.msra.mxu0 %v910
        %962 = vmatpush.bf16.msra.mxu0 %v905
        %963 = vmatpush.bf16.msra.mxu0 %v900
        %964 = vmatpush.bf16.msra.mxu0 %v895
        %965 = vmatpush.bf16.msra.mxu0 %v890
        %966 = vmatpush.bf16.msra.mxu0 %v885
        %967 = vmatpush.bf16.msra.mxu0 %v880
        %968 = vmatmul.bf16.gmra.mxu0 %v691
        %v969 = vpop.f32.mrf.mxu0
        %v970 = vadd.f32 %v742, %v969
        %v971 = vpop.f32.mrf.mxu0
        %972 = vdwg.mxu0
        %973 = vmatpush.bf16.msra.mxu0 %v916
        %974 = vmatpush.bf16.msra.mxu0 %v911
        %975 = vmatpush.bf16.msra.mxu0 %v906
        %976 = vmatpush.bf16.msra.mxu0 %v901
        %977 = vmatpush.bf16.msra.mxu0 %v896
        %978 = vmatpush.bf16.msra.mxu0 %v891
        %979 = vmatpush.bf16.msra.mxu0 %v886
        %980 = vmatpush.bf16.msra.mxu0 %v881
        %981 = vmatmul.bf16.gmra.mxu0 %v691
        %v982 = vpop.f32.mrf.mxu0
        %v983 = vadd.f32 %v743, %v982
        %v984 = vpop.f32.mrf.mxu0
        %985 = vdwg.mxu0
        %986 = vmatpush.bf16.msra.mxu0 %v917
        %987 = vmatpush.bf16.msra.mxu0 %v912
        %988 = vmatpush.bf16.msra.mxu0 %v907
        %989 = vmatpush.bf16.msra.mxu0 %v902
        %990 = vmatpush.bf16.msra.mxu0 %v897
        %991 = vmatpush.bf16.msra.mxu0 %v892
        %992 = vmatpush.bf16.msra.mxu0 %v887
        %993 = vmatpush.bf16.msra.mxu0 %v882
        %994 = vmatmul.bf16.gmra.mxu0 %v691
        %v995 = vpop.f32.mrf.mxu0
        %v996 = vadd.f32 %v744, %v995
        %v997 = vpop.f32.mrf.mxu0
        %998 = vdwg.mxu0
        %999 = vmatpush.bf16.msra.mxu0 %v918
        %1000 = vmatpush.bf16.msra.mxu0 %v913
        %1001 = vmatpush.bf16.msra.mxu0 %v908
        %1002 = vmatpush.bf16.msra.mxu0 %v903
        %1003 = vmatpush.bf16.msra.mxu0 %v898
        %1004 = vmatpush.bf16.msra.mxu0 %v893
        %1005 = vmatpush.bf16.msra.mxu0 %v888
        %1006 = vmatpush.bf16.msra.mxu0 %v883
        %1007 = vmatmul.bf16.gmra.mxu0 %v691
        %v1008 = vpop.f32.mrf.mxu0
        %v1009 = vadd.f32 %v745, %v1008
        %v1010 = vpop.f32.mrf.mxu0
        %1011 = vdwg.mxu0
        %1012 = vmatpush.bf16.msra.mxu0 %v919
        %1013 = vmatpush.bf16.msra.mxu0 %v914
        %1014 = vmatpush.bf16.msra.mxu0 %v909
        %1015 = vmatpush.bf16.msra.mxu0 %v904
        %1016 = vmatpush.bf16.msra.mxu0 %v899
        %1017 = vmatpush.bf16.msra.mxu0 %v894
        %1018 = vmatpush.bf16.msra.mxu0 %v889
        %1019 = vmatpush.bf16.msra.mxu0 %v884
        %1020 = vmatmul.bf16.gmra.mxu0 %v691
        %v1021 = vpop.f32.mrf.mxu0
        %v1022 = vadd.f32 %v746, %v1021
        %v1023 = vpop.f32.mrf.mxu0
        %1024 = vdwg.mxu0
        %1025 = vst [vmem:[%s290] sm:$0xff] %v970
        %1026 = vst [vmem:[%s290 + $0x8] sm:$0xff] %v983
        %1027 = vst [vmem:[%s290 + $0x10] sm:$0xff] %v996
        %1028 = vst [vmem:[%s290 + $0x18] sm:$0xff] %v1009
        %1029 = vst [vmem:[%s290 + $0x20] sm:$0xff] %v1022
        %s1030 = sand.u32 %s142, 1
        %s1031 = scalar_lea.sflag [#allocation4], %s1030
        %s1032 = sand.u32 %s142, 1
        %s1033 = smul.addr %s1032, 40
        %s1034 = scalar_lea.vmem [#allocation10], %s1033
        // Predicated region
        $region57: #{mlp_forward.1} parent=39 // pred_check
          %p1035 = pneg %p152
        $region58: #{mlp_forward.1} parent=39 // pred_check_branch
          %1037 = sbr.rel (%p1035) target = $region60
        $region59: #{mlp_forward.1} parent=39 // pred_region
          %1039 = vsyncadd %s1031, 0
          %s1040 = smul.addr %s24, 5
          %s1041 = smul.addr %s1040, 8
          %s1042 = scalar_lea.hbm %s5, %s1041
          %s1044 = sshll.u32 %s1034, 4
          %s1045 = int_to_ptr.vmem [resolvable:$true] %s1044
          %s1046 = sshll.u32 %s1042, 4
          %s1047 = int_to_ptr.hbm [resolvable:$true] %s1046
          %1049 = dma.vmem_to_hbm [thread:$0]  %s1045, 640, %s1047, %s1031
        $region60: #{mlp_forward.1} parent=39 // pred_fallthru
          _
      $region40: #{mlp_forward.1} parent=5 // pred_fallthru
        _
      %p1050 = scmp.le.s32.totalorder 2, %s19
      // Predicated region
      $region61: #{mlp_forward.1} parent=5 // pred_check
        %p1051 = pneg %p1050
      $region62: #{mlp_forward.1} parent=5 // pred_check_branch
        %1053 = sbr.rel (%p1051) target = $region64
      $region63: #{mlp_forward.1} parent=5 // pred_region
        %s1054 = ssub.s32 %s19, 2
        // Predicated region
        $region65: #{mlp_forward.1} parent=63 // pred_check
          %p1055 = pneg %p158
        $region66: #{mlp_forward.1} parent=63 // pred_check_branch
          %1057 = sbr.rel (%p1055) target = $region68
        $region67: #{mlp_forward.1} parent=63 // pred_region
          %s1058 = sand.u32 %s143, 1
          %s1059 = scalar_lea.sflag [#allocation4], %s1058
          %s1060 = sand.u32 %s143, 1
          %s1061 = smul.addr %s1060, 40
          %s1062 = scalar_lea.vmem [#allocation10], %s1061
          %1064 = dma.done %s1059, 640
        $region68: #{mlp_forward.1} parent=63 // pred_fallthru
          _
      $region64: #{mlp_forward.1} parent=5 // pred_fallthru
        _
    $region6: #{mlp_forward.1} parent=1 // loop_footer
      %s23 = sadd.s32 1, %s19
    $region7: #{mlp_forward.1} parent=1 // loop_footer_branch
      %18 = sbr.rel target = $region3
    $region8: #{mlp_forward.1} parent=1 // loop_exit
      _
    %1065 = vsyncpa [#allocation3], 1
    %s1066 = scalar_lea.sflag [#allocation3], 1
    %1067 = vsyncpa %s1066, 1
    %1068 = vsyncpa [#allocation6], 1
    %1069 = vsyncpa [#allocation9], 1
    %1070 = vsyncpa [#allocation4], 1
    %s1071 = scalar_lea.sflag [#allocation4], 1
    %1072 = vsyncpa %s1071, 1

</llo_original>
